<compile_context>
chip_gen: v7x
topology: tpu7x:2x2x1
jax: 0.10.0
libtpu: 0.0.40
codegen_flags: <defaults>
</compile_context>

<pallas_src>
import jax
import jax.numpy as jnp
from jax.experimental import pallas as pl
from jax.experimental.pallas import tpu as pltpu


TM_ALIGN = 16                       # row-tile alignment: works for f32 (8) and bf16 (16) packing
VMEM_TILE_BUDGET = 16 * 1024 * 1024  # keep double-buffered tiles under this (v7x headroom)


def _round_up(x, m):
    return ((x + m - 1) // m) * m


def _linear_kernel(x_ref, wt_ref, b_ref, o_ref):
    # x_ref:  (tm, in_dim)       row tile of the input (bf16 or f32)
    # wt_ref: (in_dim, out_dim)  VMEM-resident pre-transposed weight (same dtype as x)
    # b_ref:  (1, out_dim)       VMEM-resident f32 bias
    # o_ref:  (tm, out_dim)      true-width f32 output tile (masked stores, no pad bytes)
    acc = jnp.dot(x_ref[...], wt_ref[...], preferred_element_type=jnp.float32)
    o_ref[...] = (acc + b_ref[...]).astype(o_ref.dtype)


def prepare_linear_params(weight, bias, compute_dtype=jnp.bfloat16):
    """One-time preprocessing of PyTorch-layout Linear params.

    weight: (out_dim, in_dim) -> wt: (in_dim, out_dim) in compute_dtype (transposed once)
    bias:   (out_dim,)        -> b:  (1, out_dim) float32
    """
    out_dim, in_dim = weight.shape
    wt = jnp.asarray(weight).T.astype(compute_dtype)            # (in_dim, out_dim)
    b = jnp.asarray(bias).reshape(1, out_dim).astype(jnp.float32)
    return wt, b


def _choose_tm(n, tm_req, bytes_per_row):
    # Never larger than the (aligned) batch.
    tm = max(TM_ALIGN, min(tm_req, _round_up(n, TM_ALIGN)))
    # v7x has 2 TensorCores; dimension_semantics=("parallel",) shards the row
    # grid across them.  Keep >= 2 reasonably balanced row tiles when there is
    # enough work so one core is never idle (harmless on v5e/v6e).
    if n > 2 * TM_ALIGN:
        tm = min(tm, _round_up(-(-n // 2), TM_ALIGN))
    # VMEM guard (mainly for v7x's 64 MiB physical VMEM, relevant only if
    # out_dim / in_dim grow large): double-buffered x + out tiles per row.
    max_tm = VMEM_TILE_BUDGET // (2 * max(bytes_per_row, 1))
    max_tm = max(TM_ALIGN, (max_tm // TM_ALIGN) * TM_ALIGN)
    tm = min(tm, max_tm)
    return _round_up(tm, TM_ALIGN)


def linear_forward(x, wt, b, *, tm=2048):
    """y = x @ W^T + b via a row-tiled Pallas kernel with true-width output.

    x:  (N, in_dim)
    wt: (in_dim, out_dim)  pre-transposed weight from prepare_linear_params
    b:  (1, out_dim)       f32 bias from prepare_linear_params
    """
    n, in_dim = x.shape
    k, out_dim = wt.shape
    assert k == in_dim, (k, in_dim)

    # Compute dtype follows the prepared weight (bf16 by default).  For the
    # full HBM-read win at large N, pass x already in that dtype.
    if x.dtype != wt.dtype:
        x = x.astype(wt.dtype)

    x_itemsize = jnp.dtype(x.dtype).itemsize
    wt_itemsize = jnp.dtype(wt.dtype).itemsize
    bytes_per_row = in_dim * x_itemsize + out_dim * 4
    tm = _choose_tm(n, tm, bytes_per_row)
    grid = (pl.cdiv(n, tm),)   # partial tail block handled by Pallas masking

    cost = pl.CostEstimate(
        flops=2 * n * in_dim * out_dim,
        transcendentals=0,
        bytes_accessed=(
            n * in_dim * x_itemsize       # x read
            + in_dim * out_dim * wt_itemsize  # weight read (once, resident)
            + out_dim * 4                 # bias read
            + n * out_dim * 4             # output write (true width, no padding)
        ),
    )

    return pl.pallas_call(
        _linear_kernel,
        out_shape=jax.ShapeDtypeStruct((n, out_dim), jnp.float32),
        grid_spec=pltpu.PrefetchScalarGridSpec(
            num_scalar_prefetch=0,
            grid=grid,
            in_specs=[
                pl.BlockSpec((tm, in_dim), lambda i: (i, 0)),       # x: row-tiled
                pl.BlockSpec((in_dim, out_dim), lambda i: (0, 0)),  # W^T: VMEM-resident
                pl.BlockSpec((1, out_dim), lambda i: (0, 0)),       # b: VMEM-resident
            ],
            out_specs=pl.BlockSpec((tm, out_dim), lambda i: (i, 0)),  # true-width output
        ),
        compiler_params=pltpu.CompilerParams(
            dimension_semantics=("parallel",),  # independent row tiles -> megacore-friendly
        ),
        cost_estimate=cost,
    )(x, wt, b)


if __name__ == "__main__":
    # Small shapes consistent with the module: in_dimn=32, out_dimn=8, batch=16.
    in_dimn, out_dimn, batch = 32, 8, 16

    key = jax.random.PRNGKey(0)
    kx, kw, kb = jax.random.split(key, 3)

    # Deterministic init mimicking PyTorch Linear's U(-1/sqrt(in), 1/sqrt(in)).
    bound = 1.0 / (in_dimn ** 0.5)
    weight = jax.random.uniform(kw, (out_dimn, in_dimn), jnp.float32, -bound, bound)
    bias = jax.random.uniform(kb, (out_dimn,), jnp.float32, -bound, bound)
    x = jax.random.normal(kx, (batch, in_dimn), jnp.float32)

    # One-time param prep (transpose + dtype cast) outside the forward call.
    wt, b = prepare_linear_params(weight, bias)          # bf16 compute path (default)

    y = linear_forward(x, wt, b)
    y = jax.block_until_ready(y)
    assert y.shape == (batch, out_dimn)

    # Tight check against a reference using the same bf16 input quantization
    # (products exact, f32 accumulation), then a loose check vs. the exact
    # f32 module output.
    x_q = x.astype(jnp.bfloat16).astype(jnp.float32)
    w_q = weight.astype(jnp.bfloat16).astype(jnp.float32)
    y_ref_q = x_q @ w_q.T + bias
    y_ref_f32 = x @ weight.T + bias
    assert jnp.allclose(y, y_ref_q, atol=1e-4, rtol=1e-4)
    assert jnp.allclose(y, y_ref_f32, atol=5e-2, rtol=5e-2)

    # Exact-f32 path is also available:
    wt32, b32 = prepare_linear_params(weight, bias, compute_dtype=jnp.float32)
    y32 = jax.block_until_ready(linear_forward(x, wt32, b32))
    assert jnp.allclose(y32, y_ref_f32, atol=1e-5, rtol=1e-5)

    print("KERNEL_OK")
</pallas_src>

<mosaic_0001>
module attributes {stable_mosaic.version = 11 : i64} {
  func.func @_linear_kernel(%arg0: i32, %arg1: memref<16x32xbf16, #tpu.memory_space<vmem>>, %arg2: memref<32x8xbf16, #tpu.memory_space<vmem>>, %arg3: memref<1x8xf32, #tpu.memory_space<vmem>>, %arg4: memref<16x8xf32, #tpu.memory_space<vmem>>) attributes {dimension_semantics = [#tpu.dimension_semantics<parallel>], iteration_bounds = array<i64: 1>, scalar_prefetch = 0 : i64, scratch_operands = 0 : i64, tpu.core_type = #tpu.core_type<tc>, window_params = [{transform_indices = @transform_0, window_bounds = array<i64: 16, 32>}, {pipeline_mode = #tpu.pipeline_mode<synchronous>, transform_indices = @transform_1, window_bounds = array<i64: 32, 8>}, {pipeline_mode = #tpu.pipeline_mode<synchronous>, transform_indices = @transform_2, window_bounds = array<i64: 1, 8>}, {transform_indices = @transform_3, window_bounds = array<i64: 16, 8>}]} {
    %c0 = arith.constant 0 : index
    %c0_0 = arith.constant 0 : index
    %0 = vector.load %arg1[%c0, %c0_0] : memref<16x32xbf16, #tpu.memory_space<vmem>>, vector<16x32xbf16>
    %c0_1 = arith.constant 0 : index
    %c0_2 = arith.constant 0 : index
    %1 = vector.load %arg2[%c0_1, %c0_2] : memref<32x8xbf16, #tpu.memory_space<vmem>>, vector<32x8xbf16>
    %cst = arith.constant dense<0.000000e+00> : vector<16x8xf32>
    %2 = tpu.matmul %0, %1, %cst {dimension_numbers = #tpu.dot_dimension_numbers<[1], [0], [0], [1], [0, 0, 1, 1], [], []>} : vector<16x32xbf16>, vector<32x8xbf16>, vector<16x8xf32> -> vector<16x8xf32>
    %c0_3 = arith.constant 0 : index
    %c0_4 = arith.constant 0 : index
    %3 = vector.load %arg3[%c0_3, %c0_4] : memref<1x8xf32, #tpu.memory_space<vmem>>, vector<1x8xf32>
    %4 = vector.broadcast %3 : vector<1x8xf32> to vector<16x8xf32>
    %5 = arith.addf %2, %4 : vector<16x8xf32>
    %c0_5 = arith.constant 0 : index
    %c0_6 = arith.constant 0 : index
    %6 = vector.load %arg4[%c0_5, %c0_6] : memref<16x8xf32, #tpu.memory_space<vmem>>, vector<16x8xf32>
    tpu.vector_store %arg4[%c0_5, %c0_6], %5 {strides = array<i32>} : memref<16x8xf32, #tpu.memory_space<vmem>>, vector<16x8xf32>,
    return
  }
  func.func @transform_0(%arg0: i32) -> (i32, i32) {
    %c0_i32 = arith.constant 0 : i32
    %c0_i32_0 = arith.constant 0 : i32
    return %arg0, %c0_i32 : i32, i32
  }
  func.func @transform_1(%arg0: i32) -> (i32, i32) {
    %c0_i32 = arith.constant 0 : i32
    %c0_i32_0 = arith.constant 0 : i32
    %c0_i32_1 = arith.constant 0 : i32
    return %c0_i32, %c0_i32_0 : i32, i32
  }
  func.func @transform_2(%arg0: i32) -> (i32, i32) {
    %c0_i32 = arith.constant 0 : i32
    %c0_i32_0 = arith.constant 0 : i32
    %c0_i32_1 = arith.constant 0 : i32
    return %c0_i32, %c0_i32_0 : i32, i32
  }
  func.func @transform_3(%arg0: i32) -> (i32, i32) {
    %c0_i32 = arith.constant 0 : i32
    %c0_i32_0 = arith.constant 0 : i32
    return %arg0, %c0_i32 : i32, i32
  }
}

</mosaic_0001>

<llo_original>
// kernel: tpu_custom_call.1
$region0: #{tpu_custom_call.1}
  #allocation0 [shape = 'u32[]', space=smem, size = 0x4, offset = 0x4, fixed_abs, tag = 'smem constant byte address 0x4 - core index']
  #allocation1 [shape = 'u32[144,128]{1,0:T(1,128)}', space=vmem, size = 0x12000, scoped, tag = 'internal scratch']
  %s0 = inlined_call_operand.vmem [shape: bf16[16,32], index: 0, kind: input, shape index: {}]
  %s1 = inlined_call_operand.vmem [shape: bf16[32,8], index: 1, kind: input, shape index: {}]
  %s2 = inlined_call_operand.vmem [shape: f32[1,8], index: 2, kind: input, shape index: {}]
  %s3 = inlined_call_operand.vmem [shape: f32[16,8], index: 3, kind: output, shape index: {}]
  %s4 = sld [smem:[#allocation0]]
  $region22: #{tpu_custom_call.1} parent=0
    _
  %s6 = ssub.s32 1, %s4
  %s7 = scalar_select 0, %s6, %s4
  // Predicated region
  $region2: #{tpu_custom_call.1} parent=0 // pred_check
    _
  $region3: #{tpu_custom_call.1} parent=0 // pred_check_branch
    %9 = sbr.rel (0) target = $region5
  $region4: #{tpu_custom_call.1} parent=0 // pred_region
    _
  $region5: #{tpu_custom_call.1} parent=0 // pred_fallthru
    _
  // Predicated region
  $region6: #{tpu_custom_call.1} parent=0 // pred_check
    _
  $region7: #{tpu_custom_call.1} parent=0 // pred_check_branch
    %11 = sbr.rel (0) target = $region9
  $region8: #{tpu_custom_call.1} parent=0 // pred_region
    _
  $region9: #{tpu_custom_call.1} parent=0 // pred_fallthru
    _
  // Predicated region
  $region10: #{tpu_custom_call.1} parent=0 // pred_check
    _
  $region11: #{tpu_custom_call.1} parent=0 // pred_check_branch
    %13 = sbr.rel (0) target = $region13
  $region12: #{tpu_custom_call.1} parent=0 // pred_region
    _
  $region13: #{tpu_custom_call.1} parent=0 // pred_fallthru
    _
  %v15 = vld [vmem:[%s0] sm:$0xf]
  %v16 = vld [vmem:[%s0 + $0x4] sm:$0xf]
  %v17 = vld [vmem:[%s1] sm:$0xf]
  %v18 = vld [vmem:[%s1 + $0x4] sm:$0xf]
  %v19 = vld [vmem:[%s1 + $0x8] sm:$0xf]
  %v20 = vld [vmem:[%s1 + $0xc] sm:$0xf]
  %v21 = vld [vmem:[%s2] sm:$0x1]
  %v23 = vlaneseq
  %v24 = vshrl.u32 %v23, 7
  %v25 = vsub.s32 0, %v24
  %v26 = vrot.slane %v21, %v25
  %v30 = vunpack.c.l.b16 %v15
  %v31 = vunpack.c.l.b16 %v16
  %v32 = vpack.c.b16 %v31, %v30
  %v37 = vunpack.c.l.b16 %v17
  %v38 = vunpack.c.l.b16 %v18
  %v39 = vunpack.c.l.b16 %v19
  %v40 = vunpack.c.l.b16 %v20
  %v41 = vpack.c.b16 %v38, %v37
  %v42 = vpack.c.b16 %v40, %v39
  %vm45 = vcmask 261120
  %v47 = vsel %vm45, %v32, 0
  %49 = vmatprep.subr.bf16.mxu0 0
  %50 = vmatpush1.bf16.msra.mxu0 %v41
  %51 = vmatprep.subr.bf16.mxu0 0
  %52 = vmatpush1.bf16.msra.mxu0 %v42
  %53 = vmatprep.subr.bf16.mxu0 0
  %54 = vmatpush1.bf16.msra.mxu0 0
  %55 = vmatprep.subr.bf16.mxu0 0
  %56 = vmatpush1.bf16.msra.mxu0 0
  %57 = vmatprep.subr.bf16.mxu0 0
  %58 = vmatpush1.bf16.msra.mxu0 0
  %59 = vmatprep.subr.bf16.mxu0 0
  %60 = vmatpush1.bf16.msra.mxu0 0
  %61 = vmatprep.subr.bf16.mxu0 0
  %62 = vmatpush1.bf16.msra.mxu0 0
  %63 = vmatprep.subr.bf16.mxu0 0
  %64 = vmatpush1.bf16.msra.mxu0 0
  %65 = vmatprep.subr.bf16.mxu0 0
  %66 = vmatpush1.bf16.msra.mxu0 0
  %67 = vmatprep.subr.bf16.mxu0 0
  %68 = vmatpush1.bf16.msra.mxu0 0
  %69 = vmatprep.subr.bf16.mxu0 0
  %70 = vmatpush1.bf16.msra.mxu0 0
  %71 = vmatprep.subr.bf16.mxu0 0
  %72 = vmatpush1.bf16.msra.mxu0 0
  %73 = vmatprep.subr.bf16.mxu0 0
  %74 = vmatpush1.bf16.msra.mxu0 0
  %75 = vmatprep.subr.bf16.mxu0 0
  %76 = vmatpush1.bf16.msra.mxu0 0
  %77 = vmatprep.subr.bf16.mxu0 0
  %78 = vmatpush1.bf16.msra.mxu0 0
  %79 = vmatprep.subr.bf16.mxu0 0
  %80 = vmatpush1.bf16.msra.mxu0 0
  %81 = vmatprep.mubr.bf16.mxu0 0
  %82 = vmatmul.mubr.bf16.gmra.mrb[0].mxu0 %v47
  %v83 = vpop.f32.mrb[0].mxu0
  %v84 = vadd.f32 %v26, %v83
  %v85 = vpop.f32.mrb[0].mxu0
  %v86 = vpop.f32.mrb[0].mxu0
  %v87 = vadd.f32 %v26, %v86
  %v88 = vpop.f32.mrb[0].mxu0
  %89 = vdwg.mxu0
  %vm90 = vcmask 64512
  %91 = vst.msk [vmem:[%s3] sm:$0xff] %vm90, %v84
  %92 = vst.msk [vmem:[%s3 + $0x8] sm:$0xff] %vm90, %v87
  // Predicated region
  $region14: #{tpu_custom_call.1} parent=0 // pred_check
    _
  $region15: #{tpu_custom_call.1} parent=0 // pred_check_branch
    %94 = sbr.rel (0) target = $region17
  $region16: #{tpu_custom_call.1} parent=0 // pred_region
    _
  $region17: #{tpu_custom_call.1} parent=0 // pred_fallthru
    _
  // Predicated region
  $region18: #{tpu_custom_call.1} parent=0 // pred_check
    _
  $region19: #{tpu_custom_call.1} parent=0 // pred_check_branch
    %96 = sbr.rel (0) target = $region21
  $region20: #{tpu_custom_call.1} parent=0 // pred_region
    _
  $region21: #{tpu_custom_call.1} parent=0 // pred_fallthru
    _

</llo_original>
